<compile_context>
chip_gen: v7x
topology: tpu7x:2x2x1
jax: 0.10.0
libtpu: 0.0.40
codegen_flags: <defaults>
</compile_context>

<pallas_src>
import functools
import math

import jax
import jax.numpy as jnp
from jax.experimental import pallas as pl
from jax.experimental.pallas import tpu as pltpu


def _ffn_kernel(x_ref, w1_ref, b1_ref, w2_ref, b2_ref, o_ref, acc_ref):
    k = pl.program_id(1)

    @pl.when(k == 0)
    def _():
        acc_ref[...] = jnp.zeros_like(acc_ref)

    # First projection (bf16 x bf16 -> f32 on the MXU) + bias + ReLU in f32.
    h = jnp.dot(x_ref[...], w1_ref[...], preferred_element_type=jnp.float32)
    h = jnp.maximum(h + b1_ref[...], 0.0)

    # Dropout: module evaluated in inference mode => identity.
    # TODO(synk): training-mode dropout (pltpu.prng_seed + stateful_bernoulli) not wired in.

    # Second projection: cast activations to the weight dtype (bf16) for the MXU,
    # accumulate the partial product over d_ff chunks in f32.
    acc_ref[...] += jnp.dot(h.astype(w2_ref.dtype), w2_ref[...],
                            preferred_element_type=jnp.float32)

    @pl.when(k == pl.num_programs(1) - 1)
    def _():
        # Add b2 exactly once, at writeback.
        o_ref[...] = (acc_ref[...] + b2_ref[...]).astype(o_ref.dtype)


def _round_up(n, m):
    return ((n + m - 1) // m) * m


def _pick_tile_ff(d_ff, target):
    """Largest chunk <= target that is a multiple of 128 and divides d_ff."""
    if d_ff <= target:
        return d_ff
    t = (target // 128) * 128
    while t >= 128:
        if d_ff % t == 0:
            return t
        t -= 128
    return d_ff  # fall back to full d_ff (still legal: equals full dim)


@functools.partial(jax.jit,
                   static_argnames=("tile_m", "tile_ff_target", "use_bf16"))
def feed_forward(x, w1, b1, w2, b2, *, tile_m=256, tile_ff_target=512,
                 use_bf16=True):
    """x: (batch, time, d_model) -> (batch, time, d_model).

    Weights are stored already-transposed: w1 (d_model, d_ff), w2 (d_ff, d_model).
    """
    B, T, d_model = x.shape
    d_ff = w1.shape[1]
    M = B * T
    out_dtype = x.dtype
    compute_dtype = jnp.bfloat16 if use_bf16 else x.dtype

    # --- tile selection -------------------------------------------------
    m_align = 16 if use_bf16 else 8          # bf16 packs 16 rows / sublane group
    tm = min(tile_m, _round_up(M, m_align))  # don't over-tile tiny inputs
    tm = _round_up(tm, m_align)
    M_pad = _round_up(M, tm)
    tff = _pick_tile_ff(d_ff, tile_ff_target)

    # --- operand prep ----------------------------------------------------
    x2d = x.reshape(M, d_model).astype(compute_dtype)
    if M_pad != M:
        x2d = jnp.pad(x2d, ((0, M_pad - M), (0, 0)))
    w1c = w1.astype(compute_dtype)
    w2c = w2.astype(compute_dtype)
    b1_2d = b1.reshape(1, d_ff).astype(jnp.float32)
    b2_2d = b2.reshape(1, d_model).astype(jnp.float32)

    grid = (M_pad // tm, d_ff // tff)

    # Advisory cost estimate for XLA's scheduler.
    itemsize = jnp.dtype(compute_dtype).itemsize
    cost = pl.CostEstimate(
        flops=2 * M * d_model * d_ff * 2,          # two matmuls
        transcendentals=0,
        bytes_accessed=(x2d.size * itemsize
                        + w1c.size * itemsize
                        + w2c.size * itemsize
                        + b1_2d.size * 4 + b2_2d.size * 4
                        + M_pad * d_model * jnp.dtype(out_dtype).itemsize),
    )

    out2d = pl.pallas_call(
        _ffn_kernel,
        out_shape=jax.ShapeDtypeStruct((M_pad, d_model), out_dtype),
        grid_spec=pltpu.PrefetchScalarGridSpec(
            num_scalar_prefetch=0,
            grid=grid,
            in_specs=[
                pl.BlockSpec((tm, d_model), lambda i, k: (i, 0)),   # x rows
                pl.BlockSpec((d_model, tff), lambda i, k: (0, k)),  # W1 chunk
                pl.BlockSpec((1, tff), lambda i, k: (0, k)),        # b1 chunk
                pl.BlockSpec((tff, d_model), lambda i, k: (k, 0)),  # W2 chunk
                pl.BlockSpec((1, d_model), lambda i, k: (0, 0)),    # b2
            ],
            out_specs=pl.BlockSpec((tm, d_model), lambda i, k: (i, 0)),
            scratch_shapes=[pltpu.VMEM((tm, d_model), jnp.float32)],
        ),
        compiler_params=pltpu.CompilerParams(
            dimension_semantics=("parallel", "arbitrary"),
            vmem_limit_bytes=48 * 1024 * 1024,  # stays under v7x's 64 MiB physical
        ),
        cost_estimate=cost,
    )(x2d, w1c, b1_2d, w2c, b2_2d)

    if M_pad != M:
        out2d = out2d[:M]
    return out2d.reshape(B, T, d_model)


def init_params(key, d_model, d_ff, dtype=jnp.float32):
    """PyTorch-style nn.Linear init: U(-1/sqrt(fan_in), 1/sqrt(fan_in))."""
    k1, k2, k3, k4 = jax.random.split(key, 4)
    bound1 = 1.0 / math.sqrt(d_model)
    bound2 = 1.0 / math.sqrt(d_ff)
    # stored as (in_features, out_features) i.e. already transposed vs torch
    w1 = jax.random.uniform(k1, (d_model, d_ff), dtype, -bound1, bound1)
    b1 = jax.random.uniform(k2, (d_ff,), dtype, -bound1, bound1)
    w2 = jax.random.uniform(k3, (d_ff, d_model), dtype, -bound2, bound2)
    b2 = jax.random.uniform(k4, (d_model,), dtype, -bound2, bound2)
    return w1, b1, w2, b2


if __name__ == "__main__":
    # Small shapes consistent with the module: (batch, time, d_model)
    batch, time, d_model, d_ff = 2, 8, 32, 64
    key = jax.random.PRNGKey(0)
    kx, kp = jax.random.split(key)

    x = jax.random.normal(kx, (batch, time, d_model), jnp.float32)
    w1, b1, w2, b2 = init_params(kp, d_model, d_ff)

    out = feed_forward(x, w1, b1, w2, b2)
    out = jax.block_until_ready(out)
    assert out.shape == (batch, time, d_model)

    # Reference that mirrors the kernel's bf16-matmul / f32-accumulate path.
    xb = x.astype(jnp.bfloat16)
    w1b = w1.astype(jnp.bfloat16)
    w2b = w2.astype(jnp.bfloat16)
    h = jnp.maximum(
        jnp.einsum("btd,df->btf", xb, w1b,
                   preferred_element_type=jnp.float32) + b1, 0.0)
    ref_bf16 = jnp.einsum("btf,fd->btd", h.astype(jnp.bfloat16), w2b,
                          preferred_element_type=jnp.float32) + b2
    assert jnp.allclose(out, ref_bf16, atol=2e-3, rtol=2e-3)

    # Looser sanity check against the pure-f32 module semantics.
    ref_f32 = jnp.maximum(x @ w1 + b1, 0.0) @ w2 + b2
    assert jnp.allclose(out, ref_f32, atol=5e-2, rtol=5e-2)

    print("KERNEL_OK")
</pallas_src>

<mosaic_0001>
module attributes {stable_mosaic.version = 11 : i64} {
  func.func @_ffn_kernel(%arg0: i32, %arg1: i32, %arg2: memref<16x32xbf16, #tpu.memory_space<vmem>>, %arg3: memref<32x64xbf16, #tpu.memory_space<vmem>>, %arg4: memref<1x64xf32, #tpu.memory_space<vmem>>, %arg5: memref<64x32xbf16, #tpu.memory_space<vmem>>, %arg6: memref<1x32xf32, #tpu.memory_space<vmem>>, %arg7: memref<16x32xf32, #tpu.memory_space<vmem>>, %arg8: memref<16x32xf32, #tpu.memory_space<vmem>>) attributes {dimension_semantics = [#tpu.dimension_semantics<parallel>, #tpu.dimension_semantics<arbitrary>], iteration_bounds = array<i64: 1, 1>, scalar_prefetch = 0 : i64, scratch_operands = 1 : i64, tpu.core_type = #tpu.core_type<tc>, window_params = [{transform_indices = @transform_0, window_bounds = array<i64: 16, 32>}, {transform_indices = @transform_1, window_bounds = array<i64: 32, 64>}, {transform_indices = @transform_2, window_bounds = array<i64: 1, 64>}, {transform_indices = @transform_3, window_bounds = array<i64: 64, 32>}, {pipeline_mode = #tpu.pipeline_mode<synchronous>, transform_indices = @transform_4, window_bounds = array<i64: 1, 32>}, {transform_indices = @transform_5, window_bounds = array<i64: 16, 32>}]} {
    %c0_i32 = arith.constant 0 : i32
    %0 = arith.cmpi eq, %arg1, %c0_i32 : i32
    %1 = arith.extui %0 : i1 to i32
    %c0_i32_0 = arith.constant 0 : i32
    %2 = arith.cmpi ne, %1, %c0_i32_0 : i32
    scf.if %2 {
      %cst_16 = arith.constant 0.000000e+00 : f32
      %20 = vector.broadcast %cst_16 : f32 to vector<16x32xf32>
      %c0_17 = arith.constant 0 : index
      %c0_18 = arith.constant 0 : index
      %21 = vector.load %arg8[%c0_17, %c0_18] : memref<16x32xf32, #tpu.memory_space<vmem>>, vector<16x32xf32>
      tpu.vector_store %arg8[%c0_17, %c0_18], %20 {strides = array<i32>} : memref<16x32xf32, #tpu.memory_space<vmem>>, vector<16x32xf32>,
    } else {
    }
    %c0 = arith.constant 0 : index
    %c0_1 = arith.constant 0 : index
    %3 = vector.load %arg2[%c0, %c0_1] : memref<16x32xbf16, #tpu.memory_space<vmem>>, vector<16x32xbf16>
    %c0_2 = arith.constant 0 : index
    %c0_3 = arith.constant 0 : index
    %4 = vector.load %arg3[%c0_2, %c0_3] : memref<32x64xbf16, #tpu.memory_space<vmem>>, vector<32x64xbf16>
    %cst = arith.constant dense<0.000000e+00> : vector<16x64xf32>
    %5 = tpu.matmul %3, %4, %cst {dimension_numbers = #tpu.dot_dimension_numbers<[1], [0], [0], [1], [0, 0, 1, 1], [], []>} : vector<16x32xbf16>, vector<32x64xbf16>, vector<16x64xf32> -> vector<16x64xf32>
    %c0_4 = arith.constant 0 : index
    %c0_5 = arith.constant 0 : index
    %6 = vector.load %arg4[%c0_4, %c0_5] : memref<1x64xf32, #tpu.memory_space<vmem>>, vector<1x64xf32>
    %7 = vector.broadcast %6 : vector<1x64xf32> to vector<16x64xf32>
    %8 = arith.addf %5, %7 : vector<16x64xf32>
    %cst_6 = arith.constant 0.000000e+00 : f32
    %9 = vector.broadcast %cst_6 : f32 to vector<16x64xf32>
    %10 = arith.maximumf %8, %9 : vector<16x64xf32>
    %c0_7 = arith.constant 0 : index
    %c0_8 = arith.constant 0 : index
    %11 = vector.load %arg8[%c0_7, %c0_8] : memref<16x32xf32, #tpu.memory_space<vmem>>, vector<16x32xf32>
    %12 = arith.truncf %10 : vector<16x64xf32> to vector<16x64xbf16>
    %c0_9 = arith.constant 0 : index
    %c0_10 = arith.constant 0 : index
    %13 = vector.load %arg5[%c0_9, %c0_10] : memref<64x32xbf16, #tpu.memory_space<vmem>>, vector<64x32xbf16>
    %cst_11 = arith.constant dense<0.000000e+00> : vector<16x32xf32>
    %14 = tpu.matmul %12, %13, %cst_11 {dimension_numbers = #tpu.dot_dimension_numbers<[1], [0], [0], [1], [0, 0, 1, 1], [], []>} : vector<16x64xbf16>, vector<64x32xbf16>, vector<16x32xf32> -> vector<16x32xf32>
    %15 = arith.addf %11, %14 : vector<16x32xf32>
    %c0_12 = arith.constant 0 : index
    %c0_13 = arith.constant 0 : index
    %16 = vector.load %arg8[%c0_12, %c0_13] : memref<16x32xf32, #tpu.memory_space<vmem>>, vector<16x32xf32>
    tpu.vector_store %arg8[%c0_12, %c0_13], %15 {strides = array<i32>} : memref<16x32xf32, #tpu.memory_space<vmem>>, vector<16x32xf32>,
    %c0_i32_14 = arith.constant 0 : i32
    %17 = arith.cmpi eq, %arg1, %c0_i32_14 : i32
    %18 = arith.extui %17 : i1 to i32
    %c0_i32_15 = arith.constant 0 : i32
    %19 = arith.cmpi ne, %18, %c0_i32_15 : i32
    scf.if %19 {
      %c0_16 = arith.constant 0 : index
      %c0_17 = arith.constant 0 : index
      %20 = vector.load %arg8[%c0_16, %c0_17] : memref<16x32xf32, #tpu.memory_space<vmem>>, vector<16x32xf32>
      %c0_18 = arith.constant 0 : index
      %c0_19 = arith.constant 0 : index
      %21 = vector.load %arg6[%c0_18, %c0_19] : memref<1x32xf32, #tpu.memory_space<vmem>>, vector<1x32xf32>
      %22 = vector.broadcast %21 : vector<1x32xf32> to vector<16x32xf32>
      %23 = arith.addf %20, %22 : vector<16x32xf32>
      %c0_20 = arith.constant 0 : index
      %c0_21 = arith.constant 0 : index
      %24 = vector.load %arg7[%c0_20, %c0_21] : memref<16x32xf32, #tpu.memory_space<vmem>>, vector<16x32xf32>
      tpu.vector_store %arg7[%c0_20, %c0_21], %23 {strides = array<i32>} : memref<16x32xf32, #tpu.memory_space<vmem>>, vector<16x32xf32>,
    } else {
    }
    return
  }
  func.func @transform_0(%arg0: i32, %arg1: i32) -> (i32, i32) {
    %c0_i32 = arith.constant 0 : i32
    %c0_i32_0 = arith.constant 0 : i32
    return %arg0, %c0_i32 : i32, i32
  }
  func.func @transform_1(%arg0: i32, %arg1: i32) -> (i32, i32) {
    %c0_i32 = arith.constant 0 : i32
    %c0_i32_0 = arith.constant 0 : i32
    return %c0_i32, %arg1 : i32, i32
  }
  func.func @transform_2(%arg0: i32, %arg1: i32) -> (i32, i32) {
    %c0_i32 = arith.constant 0 : i32
    %c0_i32_0 = arith.constant 0 : i32
    return %c0_i32, %arg1 : i32, i32
  }
  func.func @transform_3(%arg0: i32, %arg1: i32) -> (i32, i32) {
    %c0_i32 = arith.constant 0 : i32
    %c0_i32_0 = arith.constant 0 : i32
    return %arg1, %c0_i32 : i32, i32
  }
  func.func @transform_4(%arg0: i32, %arg1: i32) -> (i32, i32) {
    %c0_i32 = arith.constant 0 : i32
    %c0_i32_0 = arith.constant 0 : i32
    %c0_i32_1 = arith.constant 0 : i32
    return %c0_i32, %c0_i32_0 : i32, i32
  }
  func.func @transform_5(%arg0: i32, %arg1: i32) -> (i32, i32) {
    %c0_i32 = arith.constant 0 : i32
    %c0_i32_0 = arith.constant 0 : i32
    return %arg0, %c0_i32 : i32, i32
  }
}

</mosaic_0001>

<llo_original>
// kernel: feed_forward.1
$region0: #{feed_forward.1}
  #allocation0 [shape = 'u32[]', space=smem, size = 0x4, offset = 0x4, fixed_abs, tag = 'smem constant byte address 0x4 - core index']
  #allocation1 [shape = 'u32[144,128]{1,0:T(1,128)}', space=vmem, size = 0x12000, scoped, tag = 'internal scratch']
  #allocation2 [shape = 'f32[16,32]{1,0:T(8,128)}', space=vmem, size = 0x2000, scoped, tag = 'scratch operand']
  %s0 = inlined_call_operand.vmem [shape: bf16[16,32], index: 0, kind: input, shape index: {}]
  %s1 = inlined_call_operand.vmem [shape: bf16[32,64], index: 1, kind: input, shape index: {}]
  %s2 = inlined_call_operand.vmem [shape: f32[1,64], index: 2, kind: input, shape index: {}]
  %s3 = inlined_call_operand.vmem [shape: bf16[64,32], index: 3, kind: input, shape index: {}]
  %s4 = inlined_call_operand.vmem [shape: f32[1,32], index: 4, kind: input, shape index: {}]
  %s5 = inlined_call_operand.hbm [shape: f32[16,32], index: 5, kind: output, shape index: {}]
  %s6 = sld [smem:[#allocation0]]
  $region38: #{feed_forward.1} parent=0
    _
  %s8 = ssub.s32 1, %s6
  %s9 = scalar_select 0, %s8, %s6
  $region1: #{feed_forward.1} parent=0
    #allocation3 [shape = 'u8[8192]{0}', space=vmem, size = 0x2000, scoped, tag = 'output window, operand 0, single buffered']
    #allocation4 [shape = 's32[1]{0}', space=sflag, size = 0x4, scoped, tag = 'scoped memory for feed_forward.1']
    %10 = vsyncpa [#allocation4], 0
    // Predicated region
    $region2: #{feed_forward.1} parent=1 // pred_check
      _
    $region3: #{feed_forward.1} parent=1 // pred_check_branch
      %12 = sbr.rel (0) target = $region5
    $region4: #{feed_forward.1} parent=1 // pred_region
      _
    $region5: #{feed_forward.1} parent=1 // pred_fallthru
      _
    // Predicated region
    $region6: #{feed_forward.1} parent=1 // pred_check
      _
    $region7: #{feed_forward.1} parent=1 // pred_check_branch
      %14 = sbr.rel (0) target = $region9
    $region8: #{feed_forward.1} parent=1 // pred_region
      _
    $region9: #{feed_forward.1} parent=1 // pred_fallthru
      _
    // Predicated region
    $region10: #{feed_forward.1} parent=1 // pred_check
      _
    $region11: #{feed_forward.1} parent=1 // pred_check_branch
      %16 = sbr.rel (0) target = $region13
    $region12: #{feed_forward.1} parent=1 // pred_region
      _
    $region13: #{feed_forward.1} parent=1 // pred_fallthru
      _
    // Predicated region
    $region14: #{feed_forward.1} parent=1 // pred_check
      _
    $region15: #{feed_forward.1} parent=1 // pred_check_branch
      %18 = sbr.rel (0) target = $region17
    $region16: #{feed_forward.1} parent=1 // pred_region
      _
    $region17: #{feed_forward.1} parent=1 // pred_fallthru
      _
    // Predicated region
    $region18: #{feed_forward.1} parent=1 // pred_check
      _
    $region19: #{feed_forward.1} parent=1 // pred_check_branch
      %20 = sbr.rel (0) target = $region21
    $region20: #{feed_forward.1} parent=1 // pred_region
      _
    $region21: #{feed_forward.1} parent=1 // pred_fallthru
      _
    %p22 = scmp.eq.s32.totalorder 0, 0
    // Predicated region
    $region22: #{feed_forward.1} parent=1 // pred_check
      %p23 = pneg %p22
    $region23: #{feed_forward.1} parent=1 // pred_check_branch
      %25 = sbr.rel (%p23) target = $region25
    $region24: #{feed_forward.1} parent=1 // pred_region
      %vm26 = vcmask 261120
      %27 = vst.msk [vmem:[#allocation2] sm:$0xff] %vm26, 0.0
      %28 = vst.msk [vmem:[#allocation2 + $0x8] sm:$0xff] %vm26, 0.0
    $region25: #{feed_forward.1} parent=1 // pred_fallthru
      _
    %v29 = vld [vmem:[%s0] sm:$0xf]
    %v30 = vld [vmem:[%s0 + $0x4] sm:$0xf]
    %v31 = vld [vmem:[%s1] sm:$0xf]
    %v32 = vld [vmem:[%s1 + $0x4] sm:$0xf]
    %v33 = vld [vmem:[%s1 + $0x8] sm:$0xf]
    %v34 = vld [vmem:[%s1 + $0xc] sm:$0xf]
    %v35 = vld [vmem:[%s2] sm:$0x1]
    %v37 = vlaneseq
    %v38 = vshrl.u32 %v37, 7
    %v39 = vsub.s32 0, %v38
    %v40 = vrot.slane %v35, %v39
    %v44 = vunpack.c.l.b16 %v29
    %v45 = vunpack.c.l.b16 %v30
    %v46 = vpack.c.b16 %v45, %v44
    %v51 = vunpack.c.l.b16 %v31
    %v52 = vunpack.c.l.b16 %v32
    %v53 = vunpack.c.l.b16 %v33
    %v54 = vunpack.c.l.b16 %v34
    %v55 = vpack.c.b16 %v52, %v51
    %v56 = vpack.c.b16 %v54, %v53
    %vm59 = vcmask 261120
    %v61 = vsel %vm59, %v46, 0
    %63 = vmatprep.subr.bf16.mxu0 0
    %64 = vmatpush1.bf16.msra.mxu0 %v55
    %65 = vmatprep.subr.bf16.mxu0 0
    %66 = vmatpush1.bf16.msra.mxu0 %v56
    %67 = vmatprep.subr.bf16.mxu0 0
    %68 = vmatpush1.bf16.msra.mxu0 0
    %69 = vmatprep.subr.bf16.mxu0 0
    %70 = vmatpush1.bf16.msra.mxu0 0
    %71 = vmatprep.subr.bf16.mxu0 0
    %72 = vmatpush1.bf16.msra.mxu0 0
    %73 = vmatprep.subr.bf16.mxu0 0
    %74 = vmatpush1.bf16.msra.mxu0 0
    %75 = vmatprep.subr.bf16.mxu0 0
    %76 = vmatpush1.bf16.msra.mxu0 0
    %77 = vmatprep.subr.bf16.mxu0 0
    %78 = vmatpush1.bf16.msra.mxu0 0
    %79 = vmatprep.subr.bf16.mxu0 0
    %80 = vmatpush1.bf16.msra.mxu0 0
    %81 = vmatprep.subr.bf16.mxu0 0
    %82 = vmatpush1.bf16.msra.mxu0 0
    %83 = vmatprep.subr.bf16.mxu0 0
    %84 = vmatpush1.bf16.msra.mxu0 0
    %85 = vmatprep.subr.bf16.mxu0 0
    %86 = vmatpush1.bf16.msra.mxu0 0
    %87 = vmatprep.subr.bf16.mxu0 0
    %88 = vmatpush1.bf16.msra.mxu0 0
    %89 = vmatprep.subr.bf16.mxu0 0
    %90 = vmatpush1.bf16.msra.mxu0 0
    %91 = vmatprep.subr.bf16.mxu0 0
    %92 = vmatpush1.bf16.msra.mxu0 0
    %93 = vmatprep.subr.bf16.mxu0 0
    %94 = vmatpush1.bf16.msra.mxu0 0
    %95 = vmatprep.mubr.bf16.mxu0 0
    %96 = vmatmul.mubr.bf16.gmra.mrb[0].mxu0 %v61
    %v97 = vpop.f32.mrb[0].mxu0
    %v98 = vadd.f32 %v40, %v97
    %v99 = vpop.f32.mrb[0].mxu0
    %v100 = vpop.f32.mrb[0].mxu0
    %v101 = vadd.f32 %v40, %v100
    %v102 = vpop.f32.mrb[0].mxu0
    %103 = vdwg.mxu0
    %v104 = vmax.f32 %v98, 0.0
    %v105 = vmax.f32 %v101, 0.0
    %v106 = vld [vmem:[#allocation2] sm:$0xff]
    %v107 = vld [vmem:[#allocation2 + $0x8] sm:$0xff]
    %v108 = vpack.c.bf16 %v105, %v104
    %v109 = vld [vmem:[%s3] sm:$0xf]
    %v110 = vld [vmem:[%s3 + $0x4] sm:$0xf]
    %v111 = vld [vmem:[%s3 + $0x8] sm:$0xf]
    %v112 = vld [vmem:[%s3 + $0xc] sm:$0xf]
    %v113 = vld [vmem:[%s3 + $0x10] sm:$0xf]
    %v114 = vld [vmem:[%s3 + $0x14] sm:$0xf]
    %v115 = vld [vmem:[%s3 + $0x18] sm:$0xf]
    %v116 = vld [vmem:[%s3 + $0x1c] sm:$0xf]
    %v125 = vunpack.c.l.b16 %v109
    %v126 = vunpack.c.l.b16 %v110
    %v127 = vunpack.c.l.b16 %v111
    %v128 = vunpack.c.l.b16 %v112
    %v129 = vunpack.c.l.b16 %v113
    %v130 = vunpack.c.l.b16 %v114
    %v131 = vunpack.c.l.b16 %v115
    %v132 = vunpack.c.l.b16 %v116
    %v133 = vpack.c.b16 %v126, %v125
    %v134 = vpack.c.b16 %v128, %v127
    %v135 = vpack.c.b16 %v130, %v129
    %v136 = vpack.c.b16 %v132, %v131
    %vm141 = vcmask 523264
    %v143 = vsel %vm141, %v108, 0
    %145 = vmatprep.subr.bf16.mxu0 0
    %146 = vmatpush1.bf16.msra.mxu0 %v133
    %147 = vmatprep.subr.bf16.mxu0 0
    %148 = vmatpush1.bf16.msra.mxu0 %v134
    %149 = vmatprep.subr.bf16.mxu0 0
    %150 = vmatpush1.bf16.msra.mxu0 %v135
    %151 = vmatprep.subr.bf16.mxu0 0
    %152 = vmatpush1.bf16.msra.mxu0 %v136
    %153 = vmatprep.subr.bf16.mxu0 0
    %154 = vmatpush1.bf16.msra.mxu0 0
    %155 = vmatprep.subr.bf16.mxu0 0
    %156 = vmatpush1.bf16.msra.mxu0 0
    %157 = vmatprep.subr.bf16.mxu0 0
    %158 = vmatpush1.bf16.msra.mxu0 0
    %159 = vmatprep.subr.bf16.mxu0 0
    %160 = vmatpush1.bf16.msra.mxu0 0
    %161 = vmatprep.subr.bf16.mxu0 0
    %162 = vmatpush1.bf16.msra.mxu0 0
    %163 = vmatprep.subr.bf16.mxu0 0
    %164 = vmatpush1.bf16.msra.mxu0 0
    %165 = vmatprep.subr.bf16.mxu0 0
    %166 = vmatpush1.bf16.msra.mxu0 0
    %167 = vmatprep.subr.bf16.mxu0 0
    %168 = vmatpush1.bf16.msra.mxu0 0
    %169 = vmatprep.subr.bf16.mxu0 0
    %170 = vmatpush1.bf16.msra.mxu0 0
    %171 = vmatprep.subr.bf16.mxu0 0
    %172 = vmatpush1.bf16.msra.mxu0 0
    %173 = vmatprep.subr.bf16.mxu0 0
    %174 = vmatpush1.bf16.msra.mxu0 0
    %175 = vmatprep.subr.bf16.mxu0 0
    %176 = vmatpush1.bf16.msra.mxu0 0
    %177 = vmatprep.mubr.bf16.mxu0 0
    %178 = vmatmul.mubr.bf16.gmra.mrb[0].mxu0 %v143
    %v179 = vpop.f32.mrb[0].mxu0
    %v180 = vadd.f32 0.0, %v179
    %v181 = vpop.f32.mrb[0].mxu0
    %v182 = vpop.f32.mrb[0].mxu0
    %v183 = vadd.f32 0.0, %v182
    %v184 = vpop.f32.mrb[0].mxu0
    %185 = vdwg.mxu0
    %v186 = vadd.f32 %v106, %v180
    %v187 = vadd.f32 %v107, %v183
    %188 = vst.msk [vmem:[#allocation2] sm:$0xff] %vm59, %v186
    %189 = vst.msk [vmem:[#allocation2 + $0x8] sm:$0xff] %vm59, %v187
    // Predicated region
    $region26: #{feed_forward.1} parent=1 // pred_check
      %p190 = pneg %p22
    $region27: #{feed_forward.1} parent=1 // pred_check_branch
      %192 = sbr.rel (%p190) target = $region29
    $region28: #{feed_forward.1} parent=1 // pred_region
      %v193 = vld [vmem:[#allocation2] sm:$0xff]
      %v194 = vld [vmem:[#allocation2 + $0x8] sm:$0xff]
      %v195 = vld [vmem:[%s4] sm:$0x1]
      %v197 = vlaneseq
      %v198 = vshrl.u32 %v197, 7
      %v199 = vsub.s32 0, %v198
      %v200 = vrot.slane %v195, %v199
      %v202 = vadd.f32 %v193, %v200
      %v203 = vadd.f32 %v194, %v200
      %204 = vst.msk [vmem:[#allocation3] sm:$0xff] %vm59, %v202
      %205 = vst.msk [vmem:[#allocation3 + $0x8] sm:$0xff] %vm59, %v203
    $region29: #{feed_forward.1} parent=1 // pred_fallthru
      _
    // Predicated region
    $region30: #{feed_forward.1} parent=1 // pred_check
      _
    $region31: #{feed_forward.1} parent=1 // pred_check_branch
      %207 = sbr.rel (0) target = $region33
    $region32: #{feed_forward.1} parent=1 // pred_region
      %s209 = ssub.s32 256, 256
      %210 = vsyncadd [#allocation4], %s209
      %s211 = sshll.u32 [#allocation3], 4
      %s212 = int_to_ptr.vmem [resolvable:$true] %s211
      %217 = dma.vmem_to_hbm [thread:$0]  %s212, 256, %s5, [#allocation4], 128, 128, 8
    $region33: #{feed_forward.1} parent=1 // pred_fallthru
      _
    // Predicated region
    $region34: #{feed_forward.1} parent=1 // pred_check
      _
    $region35: #{feed_forward.1} parent=1 // pred_check_branch
      %219 = sbr.rel (0) target = $region37
    $region36: #{feed_forward.1} parent=1 // pred_region
      %220 = dma.done [#allocation4], 256
    $region37: #{feed_forward.1} parent=1 // pred_fallthru
      _
    %221 = vsyncpa [#allocation4], 1

</llo_original>
